<compile_context>
chip_gen: v5e
topology: v5e:2x2
jax: 0.10.0
libtpu: 0.0.40
codegen_flags: <defaults>
</compile_context>

<pallas_src>
import jax
import jax.numpy as jnp
from jax.experimental import pallas as pl
from jax.experimental.pallas import tpu as pltpu


def _make_decomp_kernel(kernel_sizes, seq_len, pad):
    inv_n = 1.0 / len(kernel_sizes)

    def kernel(xp_ref, sea_ref, mean_ref):
        xp = xp_ref[0]                               # (L + 2*pad, C) padded series
        x = xp[pad:pad + seq_len, :]                 # original (L, C) series
        mean_acc = jnp.zeros_like(x)
        res_acc = jnp.zeros_like(x)
        for k in kernel_sizes:                       # compile-time unrolled
            p = (k - 1) // 2
            off = pad - p
            s = xp[off:off + seq_len, :]
            for j in range(1, k):                    # k static sublane-shifted slices
                s = s + xp[off + j:off + j + seq_len, :]
            mm = s * (1.0 / k)                       # moving_avg(x, kernel=k, stride=1)
            mean_acc = mean_acc + mm
            res_acc = res_acc + (x - mm)             # per-kernel residual, as in PyTorch
        sea_ref[0] = res_acc * inv_n
        mean_ref[0] = mean_acc * inv_n

    return kernel


def series_decomp_multi(x, kernel_sizes):
    """x: (B, L, C) f32; kernel_sizes: tuple of odd ints. Returns (sea, moving_mean)."""
    kernel_sizes = tuple(int(k) for k in kernel_sizes)
    assert all(k % 2 == 1 for k in kernel_sizes), (
        "odd kernel sizes required (even sizes change the pooled length and break "
        "the residual computation in the reference PyTorch module as well)")
    B, L, C = x.shape
    P = max((k - 1) // 2 for k in kernel_sizes)

    # Replicate-pad once by the largest half-window (cheap: 2*P rows per batch).
    front = jnp.broadcast_to(x[:, 0:1, :], (B, P, C))
    end = jnp.broadcast_to(x[:, L - 1:L, :], (B, P, C))
    x_pad = jnp.concatenate([front, x, end], axis=1)      # (B, L + 2P, C)

    out_sd = jax.ShapeDtypeStruct((B, L, C), x.dtype)
    return pl.pallas_call(
        _make_decomp_kernel(kernel_sizes, L, P),
        out_shape=(out_sd, out_sd),
        grid_spec=pltpu.PrefetchScalarGridSpec(
            num_scalar_prefetch=0,
            grid=(B,),                                    # one batch row per grid step
            in_specs=[pl.BlockSpec((1, L + 2 * P, C), lambda b: (b, 0, 0))],
            out_specs=(pl.BlockSpec((1, L, C), lambda b: (b, 0, 0)),
                       pl.BlockSpec((1, L, C), lambda b: (b, 0, 0))),
        ),
        compiler_params=pltpu.CompilerParams(
            dimension_semantics=("parallel",)),           # shards across v7x's 2 TCs
    )(x_pad)
    # TODO(synk): if L is ever tiled (very long sequences), the tile boundaries need
    # halo rows of width P; the current full-sequence block makes padding exact.


def reference(x, kernel_sizes):
    """Pure-JAX mirror of the PyTorch series_decomp_multi forward."""
    B, L, C = x.shape
    means, res = [], []
    for k in kernel_sizes:
        p = (k - 1) // 2
        front = jnp.repeat(x[:, 0:1, :], p, axis=1)
        end = jnp.repeat(x[:, -1:, :], p, axis=1)
        xp = jnp.concatenate([front, x, end], axis=1)     # (B, L+2p, C)
        mm = jnp.stack([xp[:, j:j + L, :] for j in range(k)], axis=0).mean(axis=0)
        means.append(mm)
        res.append(x - mm)
    sea = sum(res) / len(res)
    moving_mean = sum(means) / len(means)
    return sea, moving_mean


if __name__ == "__main__":
    B, L, C = 2, 8, 4
    KERNEL_SIZES = (3, 5)          # odd sizes, as used by FEDformer decomposition

    x = jax.random.normal(jax.random.PRNGKey(0), (B, L, C), dtype=jnp.float32)

    sea, mean = series_decomp_multi(x, KERNEL_SIZES)
    sea, mean = jax.block_until_ready((sea, mean))

    sea_ref, mean_ref = reference(x, KERNEL_SIZES)
    assert sea.shape == (B, L, C) and mean.shape == (B, L, C)
    assert jnp.allclose(sea, sea_ref, atol=1e-5, rtol=1e-5), \
        f"sea max abs err {jnp.max(jnp.abs(sea - sea_ref))}"
    assert jnp.allclose(mean, mean_ref, atol=1e-5, rtol=1e-5), \
        f"mean max abs err {jnp.max(jnp.abs(mean - mean_ref))}"

    print("KERNEL_OK")
</pallas_src>

<mosaic_0001>
module attributes {stable_mosaic.version = 11 : i64} {
  func.func @kernel(%arg0: i32, %arg1: memref<1x12x4xf32, #tpu.memory_space<vmem>>, %arg2: memref<1x8x4xf32, #tpu.memory_space<vmem>>, %arg3: memref<1x8x4xf32, #tpu.memory_space<vmem>>) attributes {dimension_semantics = [#tpu.dimension_semantics<parallel>], iteration_bounds = array<i64: 2>, scalar_prefetch = 0 : i64, scratch_operands = 0 : i64, tpu.core_type = #tpu.core_type<tc>, window_params = [{transform_indices = @transform_0, window_bounds = array<i64: 1, 12, 4>}, {transform_indices = @transform_1, window_bounds = array<i64: 1, 8, 4>}, {transform_indices = @transform_2, window_bounds = array<i64: 1, 8, 4>}]} {
    %c0 = arith.constant 0 : index
    %c0_0 = arith.constant 0 : index
    %c0_1 = arith.constant 0 : index
    %0 = vector.load %arg1[%c0, %c0_0, %c0_1] : memref<1x12x4xf32, #tpu.memory_space<vmem>>, vector<1x12x4xf32>
    %1 = vector.shape_cast %0 : vector<1x12x4xf32> to vector<12x4xf32>
    %2 = vector.extract_strided_slice %1 {offsets = [2, 0], sizes = [8, 4], strides = [1, 1]} : vector<12x4xf32> to vector<8x4xf32>
    %cst = arith.constant 0.000000e+00 : f32
    %3 = vector.broadcast %cst : f32 to vector<8x4xf32>
    %cst_2 = arith.constant 0.000000e+00 : f32
    %4 = vector.broadcast %cst_2 : f32 to vector<8x4xf32>
    %5 = vector.extract_strided_slice %1 {offsets = [1, 0], sizes = [8, 4], strides = [1, 1]} : vector<12x4xf32> to vector<8x4xf32>
    %6 = vector.extract_strided_slice %1 {offsets = [2, 0], sizes = [8, 4], strides = [1, 1]} : vector<12x4xf32> to vector<8x4xf32>
    %7 = arith.addf %5, %6 : vector<8x4xf32>
    %8 = vector.extract_strided_slice %1 {offsets = [3, 0], sizes = [8, 4], strides = [1, 1]} : vector<12x4xf32> to vector<8x4xf32>
    %9 = arith.addf %7, %8 : vector<8x4xf32>
    %cst_3 = arith.constant 0.333333343 : f32
    %10 = vector.broadcast %cst_3 : f32 to vector<8x4xf32>
    %11 = arith.mulf %9, %10 : vector<8x4xf32>
    %12 = arith.addf %3, %11 : vector<8x4xf32>
    %13 = arith.subf %2, %11 : vector<8x4xf32>
    %14 = arith.addf %4, %13 : vector<8x4xf32>
    %15 = vector.extract_strided_slice %1 {offsets = [0, 0], sizes = [8, 4], strides = [1, 1]} : vector<12x4xf32> to vector<8x4xf32>
    %16 = vector.extract_strided_slice %1 {offsets = [1, 0], sizes = [8, 4], strides = [1, 1]} : vector<12x4xf32> to vector<8x4xf32>
    %17 = arith.addf %15, %16 : vector<8x4xf32>
    %18 = vector.extract_strided_slice %1 {offsets = [2, 0], sizes = [8, 4], strides = [1, 1]} : vector<12x4xf32> to vector<8x4xf32>
    %19 = arith.addf %17, %18 : vector<8x4xf32>
    %20 = vector.extract_strided_slice %1 {offsets = [3, 0], sizes = [8, 4], strides = [1, 1]} : vector<12x4xf32> to vector<8x4xf32>
    %21 = arith.addf %19, %20 : vector<8x4xf32>
    %22 = vector.extract_strided_slice %1 {offsets = [4, 0], sizes = [8, 4], strides = [1, 1]} : vector<12x4xf32> to vector<8x4xf32>
    %23 = arith.addf %21, %22 : vector<8x4xf32>
    %cst_4 = arith.constant 2.000000e-01 : f32
    %24 = vector.broadcast %cst_4 : f32 to vector<8x4xf32>
    %25 = arith.mulf %23, %24 : vector<8x4xf32>
    %26 = arith.addf %12, %25 : vector<8x4xf32>
    %27 = arith.subf %2, %25 : vector<8x4xf32>
    %28 = arith.addf %14, %27 : vector<8x4xf32>
    %cst_5 = arith.constant 5.000000e-01 : f32
    %29 = vector.broadcast %cst_5 : f32 to vector<8x4xf32>
    %30 = arith.mulf %28, %29 : vector<8x4xf32>
    %c0_6 = arith.constant 0 : index
    %c0_7 = arith.constant 0 : index
    %c0_8 = arith.constant 0 : index
    %31 = vector.load %arg2[%c0_6, %c0_7, %c0_8] : memref<1x8x4xf32, #tpu.memory_space<vmem>>, vector<1x8x4xf32>
    %32 = vector.shape_cast %31 : vector<1x8x4xf32> to vector<8x4xf32>
    %33 = vector.shape_cast %30 : vector<8x4xf32> to vector<1x8x4xf32>
    tpu.vector_store %arg2[%c0_6, %c0_7, %c0_8], %33 {strides = array<i32>} : memref<1x8x4xf32, #tpu.memory_space<vmem>>, vector<1x8x4xf32>,
    %cst_9 = arith.constant 5.000000e-01 : f32
    %34 = vector.broadcast %cst_9 : f32 to vector<8x4xf32>
    %35 = arith.mulf %26, %34 : vector<8x4xf32>
    %c0_10 = arith.constant 0 : index
    %c0_11 = arith.constant 0 : index
    %c0_12 = arith.constant 0 : index
    %36 = vector.load %arg3[%c0_10, %c0_11, %c0_12] : memref<1x8x4xf32, #tpu.memory_space<vmem>>, vector<1x8x4xf32>
    %37 = vector.shape_cast %36 : vector<1x8x4xf32> to vector<8x4xf32>
    %38 = vector.shape_cast %35 : vector<8x4xf32> to vector<1x8x4xf32>
    tpu.vector_store %arg3[%c0_10, %c0_11, %c0_12], %38 {strides = array<i32>} : memref<1x8x4xf32, #tpu.memory_space<vmem>>, vector<1x8x4xf32>,
    return
  }
  func.func @transform_0(%arg0: i32) -> (i32, i32, i32) {
    %c0_i32 = arith.constant 0 : i32
    %c0_i32_0 = arith.constant 0 : i32
    %c0_i32_1 = arith.constant 0 : i32
    return %arg0, %c0_i32, %c0_i32_0 : i32, i32, i32
  }
  func.func @transform_1(%arg0: i32) -> (i32, i32, i32) {
    %c0_i32 = arith.constant 0 : i32
    %c0_i32_0 = arith.constant 0 : i32
    %c0_i32_1 = arith.constant 0 : i32
    return %arg0, %c0_i32, %c0_i32_0 : i32, i32, i32
  }
  func.func @transform_2(%arg0: i32) -> (i32, i32, i32) {
    %c0_i32 = arith.constant 0 : i32
    %c0_i32_0 = arith.constant 0 : i32
    %c0_i32_1 = arith.constant 0 : i32
    return %arg0, %c0_i32, %c0_i32_0 : i32, i32, i32
  }
}

</mosaic_0001>

<llo_original>
// kernel: tpu_custom_call.1
$region0: #{tpu_custom_call.1}
  #allocation0 [shape = 'u32[]', space=smem, size = 0x4, offset = 0x4, fixed_abs, tag = 'smem constant byte address 0x4 - core index']
  #allocation1 [shape = 'u32[72,128]{1,0:T(1,128)}', space=vmem, size = 0x9000, scoped, tag = 'internal scratch']
  %s0 = inlined_call_operand.vmem [shape: f32[2,12,4], index: 0, kind: input, shape index: {}]
  %s1 = inlined_call_operand.vmem [shape: f32[2,8,4], index: 1, kind: output, shape index: {0}]
  %s2 = inlined_call_operand.vmem [shape: f32[2,8,4], index: 2, kind: output, shape index: {1}]
  %3 = xla_tuple %s1, %s2
  %s4 = sld [smem:[#allocation0]]
  $region45: #{tpu_custom_call.1} parent=0
    _
  %s6 = ssub.s32 1, %s4
  %s7 = scalar_select 0, %s6, %s4
  loop: start=0, step=1, limit=4
  $region2: #{tpu_custom_call.1} parent=0 // loop_pre_header
    _
  $region3: #{tpu_custom_call.1} parent=0 // loop_header
    %s9 = sphi 0, %s13
    %p10 = scmp.ge.s32.totalorder %s9, 4
    %s19 = sphi 0, %s21
    %s22 = sphi 0, %s19
    %s23 = sphi 0, %s22
    %s39 = sphi 0, %s23
    %s45 = sphi 0, %s47
    %s48 = sphi 0, %s45
    %s49 = sphi 0, %s48
    %s65 = sphi 0, %s49
    %s71 = sphi 0, %s73
    %s74 = sphi 0, %s71
    %s75 = sphi 0, %s74
    %s91 = sphi 0, %s75
  $region4: #{tpu_custom_call.1} parent=0 // loop_header_branch
    %12 = sbr.rel (%p10) target = $region8
  $region5: #{tpu_custom_call.1} parent=0 // loop_body
    %s14 = ssub.s32 %s9, 1
    %s15 = ssub.s32 %s9, 2
    %s16 = sadd.s32 %s9, 1
    %s17 = ssub.s32 %s9, %s16
    %p18 = scmp.eq.s32.totalorder %s17, 0
    %s20 = sadd.s32 %s19, 1
    %s21 = scalar_select %p18, %s19, %s20
    %p24 = pneg %p18
    %p25 = scmp.eq.s32.totalorder %s9, 1
    %p26 = por %p24, %p25
    %p27 = scmp.ne.s32.totalorder %s19, %s22
    %p28 = scmp.eq.s32.totalorder %s9, 0
    %p29 = por %p27, %p28
    %p30 = scmp.ne.s32.totalorder %s19, %s22
    %p31 = scmp.eq.s32.totalorder %s14, 1
    %p32 = por %p30, %p31
    %p33 = scmp.ne.s32.totalorder %s22, %s23
    %p34 = scmp.eq.s32.totalorder %s14, 0
    %p35 = por %p33, %p34
    %p36 = scmp.ne.s32.totalorder %s22, %s23
    %p37 = scmp.eq.s32.totalorder %s15, 1
    %p38 = por %p36, %p37
    %p40 = scmp.ne.s32.totalorder %s23, %s39
    %p41 = scmp.eq.s32.totalorder %s15, 0
    %p42 = por %p40, %p41
    %s43 = ssub.s32 %s9, %s16
    %p44 = scmp.eq.s32.totalorder %s43, 0
    %s46 = sadd.s32 %s45, 1
    %s47 = scalar_select %p44, %s45, %s46
    %p50 = pneg %p44
    %p51 = scmp.eq.s32.totalorder %s9, 1
    %p52 = por %p50, %p51
    %p53 = scmp.ne.s32.totalorder %s45, %s48
    %p54 = scmp.eq.s32.totalorder %s9, 0
    %p55 = por %p53, %p54
    %p56 = scmp.ne.s32.totalorder %s45, %s48
    %p57 = scmp.eq.s32.totalorder %s14, 1
    %p58 = por %p56, %p57
    %p59 = scmp.ne.s32.totalorder %s48, %s49
    %p60 = scmp.eq.s32.totalorder %s14, 0
    %p61 = por %p59, %p60
    %p62 = scmp.ne.s32.totalorder %s48, %s49
    %p63 = scmp.eq.s32.totalorder %s15, 1
    %p64 = por %p62, %p63
    %p66 = scmp.ne.s32.totalorder %s49, %s65
    %p67 = scmp.eq.s32.totalorder %s15, 0
    %p68 = por %p66, %p67
    %s69 = ssub.s32 %s9, %s16
    %p70 = scmp.eq.s32.totalorder %s69, 0
    %s72 = sadd.s32 %s71, 1
    %s73 = scalar_select %p70, %s71, %s72
    %p76 = pneg %p70
    %p77 = scmp.eq.s32.totalorder %s9, 1
    %p78 = por %p76, %p77
    %p79 = scmp.ne.s32.totalorder %s71, %s74
    %p80 = scmp.eq.s32.totalorder %s9, 0
    %p81 = por %p79, %p80
    %p82 = scmp.ne.s32.totalorder %s71, %s74
    %p83 = scmp.eq.s32.totalorder %s14, 1
    %p84 = por %p82, %p83
    %p85 = scmp.ne.s32.totalorder %s74, %s75
    %p86 = scmp.eq.s32.totalorder %s14, 0
    %p87 = por %p85, %p86
    %p88 = scmp.ne.s32.totalorder %s74, %s75
    %p89 = scmp.eq.s32.totalorder %s15, 1
    %p90 = por %p88, %p89
    %p92 = scmp.ne.s32.totalorder %s75, %s91
    %p93 = scmp.eq.s32.totalorder %s15, 0
    %p94 = por %p92, %p93
    %p95 = scmp.le.s32.totalorder 1, %s9
    %p96 = scmp.lt.s32.totalorder %s9, 3
    %p97 = pnand %p95, %p96
    %p98 = pneg %p97
    // Predicated region
    $region9: #{tpu_custom_call.1} parent=5 // pred_check
      _
    $region10: #{tpu_custom_call.1} parent=5 // pred_check_branch
      %100 = sbr.rel (%p97) target = $region12
    $region11: #{tpu_custom_call.1} parent=5 // pred_region
      %s101 = ssub.s32 %s9, 1
    $region12: #{tpu_custom_call.1} parent=5 // pred_fallthru
      _
    %p102 = scmp.lt.s32.totalorder %s9, 2
    // Predicated region
    $region13: #{tpu_custom_call.1} parent=5 // pred_check
      %p103 = pneg %p102
    $region14: #{tpu_custom_call.1} parent=5 // pred_check_branch
      %105 = sbr.rel (%p103) target = $region16
    $region15: #{tpu_custom_call.1} parent=5 // pred_region
      // Predicated region
      $region17: #{tpu_custom_call.1} parent=15 // pred_check
        %p106 = pneg %p29
      $region18: #{tpu_custom_call.1} parent=15 // pred_check_branch
        %108 = sbr.rel (%p106) target = $region20
      $region19: #{tpu_custom_call.1} parent=15 // pred_region
        %p109 = scmp.lt.s32.totalorder %s9, 1
        %s110 = scalar_select %p109, %s9, 1
        %s111 = smul.addr %s110, 2
        %s112 = smul.addr %s111, 8
        %s113 = scalar_lea.vmem %s0, %s112
      $region20: #{tpu_custom_call.1} parent=15 // pred_fallthru
        _
    $region16: #{tpu_custom_call.1} parent=5 // pred_fallthru
      _
    %p114 = scmp.le.s32.totalorder 1, %s9
    %p115 = scmp.lt.s32.totalorder %s9, 3
    %p116 = pnand %p114, %p115
    %p117 = pneg %p116
    // Predicated region
    $region21: #{tpu_custom_call.1} parent=5 // pred_check
      _
    $region22: #{tpu_custom_call.1} parent=5 // pred_check_branch
      %119 = sbr.rel (%p116) target = $region24
    $region23: #{tpu_custom_call.1} parent=5 // pred_region
      %s120 = ssub.s32 %s9, 1
      %p121 = scmp.lt.s32.totalorder %s14, 1
      %s122 = scalar_select %p121, %s14, 1
      %s123 = smul.addr %s122, 2
      %s124 = smul.addr %s123, 8
      %s125 = scalar_lea.vmem %s0, %s124
      %p126 = pneg %p35
      %p127 = pneg %p32
      %p128 = pneg %p61
      %p129 = pneg %p58
      %p130 = scmp.lt.s32.totalorder %s14, 1
      %s131 = scalar_select %p130, %s14, 1
      %s132 = smul.addr %s131, 8
      %s133 = scalar_lea.vmem %s1, %s132
      %p134 = pneg %p87
      %p135 = pneg %p84
      %p136 = scmp.lt.s32.totalorder %s14, 1
      %s137 = scalar_select %p136, %s14, 1
      %s138 = smul.addr %s137, 8
      %s139 = scalar_lea.vmem %s2, %s138
      %p140 = scmp.lt.s32.totalorder %s14, 1
      %s141 = scalar_select %p140, %s14, 1
      %s142 = smul.addr %s141, 2
      %s143 = smul.addr %s142, 8
      %s144 = scalar_lea.vmem %s0, %s143
      %p145 = scmp.lt.s32.totalorder %s14, 1
      %s146 = scalar_select %p145, %s14, 1
      %s147 = smul.addr %s146, 8
      %s148 = scalar_lea.vmem %s1, %s147
      %p149 = scmp.lt.s32.totalorder %s14, 1
      %s150 = scalar_select %p149, %s14, 1
      %s151 = smul.addr %s150, 8
      %s152 = scalar_lea.vmem %s2, %s151
      %v153 = vld [vmem:[%s144] sm:$0xff]
      %v154 = vld [vmem:[%s144 + $0x8] sm:$0xf]
      %vm157 = vcmask 1046528
      %v158 = vrot.slane %v153, 1
      %v159 = vrot.slane %v154, 1
      %v160 = vsel %vm157, %v158, %v159
      %v163 = vadd.f32 %v153, %v160
      %v164 = vadd.f32 %v154, %v159
      %vm165 = vcmask 1045504
      %v166 = vrot.slane %v153, 2
      %v167 = vrot.slane %v154, 2
      %v168 = vsel %vm165, %v166, %v167
      %v171 = vadd.f32 %v163, %v168
      %v172 = vadd.f32 %v164, %v167
      %v173 = vmul.f32 %v171, 0.33333334
      %v174 = vmul.f32 %v172, 0.33333334
      %v175 = vadd.f32 %v173, 0.0
      %v176 = vadd.f32 %v174, 0.0
      %vm179 = vcmask 1040384
      %v180 = vrot.slane %v173, 7
      %v181 = vrot.slane %v174, 7
      %v182 = vsel %vm179, %v180, %v181
      %v185 = vsub.f32 %v153, %v180
      %v186 = vsub.f32 %v154, %v182
      %v187 = vadd.f32 %v185, 0.0
      %v188 = vadd.f32 %v186, 0.0
      %vm189 = vcmask 1044480
      %v190 = vrot.slane %v153, 3
      %v191 = vrot.slane %v154, 3
      %v192 = vsel %vm189, %v190, %v191
      %v194 = vadd.f32 %v171, %v192
      %vm195 = vcmask 1043456
      %v196 = vrot.slane %v153, 4
      %v197 = vrot.slane %v154, 4
      %v198 = vsel %vm195, %v196, %v197
      %v200 = vadd.f32 %v194, %v198
      %v201 = vmul.f32 %v200, 0.2
      %v203 = vrot.slane %v201, 7
      %v205 = vadd.f32 %v175, %v203
      %v206 = vadd.f32 %v176, %v203
      %v207 = vrot.slane %v201, 6
      %v209 = vsub.f32 %v153, %v207
      %v210 = vsub.f32 %v154, %v207
      %v211 = vadd.f32 %v187, %v209
      %v212 = vadd.f32 %v188, %v210
      %v213 = vmul.f32 %v211, 0.5
      %v214 = vmul.f32 %v212, 0.5
      %vm215 = vcmask 31746
      %216 = vst.msk [vmem:[%s148 - $0x2] sm:$0xfc] %vm215, %v213
      %vm217 = vcmask 25600
      %218 = vst.msk [vmem:[%s148 + $0x6] sm:$0x3] %vm217, %v214
      %v219 = vmul.f32 %v205, 0.5
      %v220 = vmul.f32 %v206, 0.5
      %vm221 = vcmask 31745
      %222 = vst.msk [vmem:[%s152 - $0x1] sm:$0xfe] %vm221, %v219
      %vm223 = vcmask 24576
      %224 = vst.msk [vmem:[%s152 + $0x7] sm:$0x1] %vm223, %v220
      %p225 = scmp.lt.s32.totalorder %s14, 1
      %s226 = scalar_select %p225, %s14, 1
      %s227 = smul.addr %s226, 8
      %s228 = scalar_lea.vmem %s1, %s227
      %p229 = scmp.lt.s32.totalorder %s14, 1
      %s230 = scalar_select %p229, %s14, 1
      %s231 = smul.addr %s230, 8
      %s232 = scalar_lea.vmem %s2, %s231
      // Predicated region
      $region25: #{tpu_custom_call.1} parent=23 // pred_check
        %p233 = pneg %p58
      $region26: #{tpu_custom_call.1} parent=23 // pred_check_branch
        %235 = sbr.rel (%p233) target = $region28
      $region27: #{tpu_custom_call.1} parent=23 // pred_region
        _
      $region28: #{tpu_custom_call.1} parent=23 // pred_fallthru
        _
      // Predicated region
      $region29: #{tpu_custom_call.1} parent=23 // pred_check
        %p236 = pneg %p84
      $region30: #{tpu_custom_call.1} parent=23 // pred_check_branch
        %238 = sbr.rel (%p236) target = $region32
      $region31: #{tpu_custom_call.1} parent=23 // pred_region
        _
      $region32: #{tpu_custom_call.1} parent=23 // pred_fallthru
        _
    $region24: #{tpu_custom_call.1} parent=5 // pred_fallthru
      _
    %p239 = scmp.le.s32.totalorder 2, %s9
    // Predicated region
    $region33: #{tpu_custom_call.1} parent=5 // pred_check
      %p240 = pneg %p239
    $region34: #{tpu_custom_call.1} parent=5 // pred_check_branch
      %242 = sbr.rel (%p240) target = $region36
    $region35: #{tpu_custom_call.1} parent=5 // pred_region
      %s243 = ssub.s32 %s9, 2
      // Predicated region
      $region37: #{tpu_custom_call.1} parent=35 // pred_check
        %p244 = pneg %p64
      $region38: #{tpu_custom_call.1} parent=35 // pred_check_branch
        %246 = sbr.rel (%p244) target = $region40
      $region39: #{tpu_custom_call.1} parent=35 // pred_region
        %p247 = scmp.lt.s32.totalorder %s15, 1
        %s248 = scalar_select %p247, %s15, 1
        %s249 = smul.addr %s248, 8
        %s250 = scalar_lea.vmem %s1, %s249
      $region40: #{tpu_custom_call.1} parent=35 // pred_fallthru
        _
      // Predicated region
      $region41: #{tpu_custom_call.1} parent=35 // pred_check
        %p251 = pneg %p90
      $region42: #{tpu_custom_call.1} parent=35 // pred_check_branch
        %253 = sbr.rel (%p251) target = $region44
      $region43: #{tpu_custom_call.1} parent=35 // pred_region
        %p254 = scmp.lt.s32.totalorder %s15, 1
        %s255 = scalar_select %p254, %s15, 1
        %s256 = smul.addr %s255, 8
        %s257 = scalar_lea.vmem %s2, %s256
      $region44: #{tpu_custom_call.1} parent=35 // pred_fallthru
        _
    $region36: #{tpu_custom_call.1} parent=5 // pred_fallthru
      _
  $region6: #{tpu_custom_call.1} parent=0 // loop_footer
    %s13 = sadd.s32 1, %s9
  $region7: #{tpu_custom_call.1} parent=0 // loop_footer_branch
    %8 = sbr.rel target = $region3
  $region8: #{tpu_custom_call.1} parent=0 // loop_exit
    _

</llo_original>
